<compile_context>
chip_gen: v7x
topology: tpu7x:2x2x1
jax: 0.10.0
libtpu: 0.0.40
codegen_flags: <defaults>
</compile_context>

<pallas_src>
import functools

import jax
import jax.numpy as jnp
from jax.experimental import pallas as pl
from jax.experimental.pallas import tpu as pltpu


def _round_up(a, b):
    return ((a + b - 1) // b) * b


def _outconv_kernel(x_ref, w_ref, b_ref, o_ref, *, row_chunk=16):
    # x_ref: (1, C_in, TR, LANE)   VMEM
    # w_ref: (C_out, C_in)         SMEM scalars
    # b_ref: (C_out,)              SMEM scalars
    # o_ref: (1, C_out, TR, LANE)  VMEM
    c_out, c_in = w_ref.shape
    _, _, tr, lane = x_ref.shape
    # Static (trace-time unrolled) loops: chunk the (TR, LANE) slab along the
    # sublane axis so the working set stays well inside the 64-vreg file.
    for r0 in range(0, tr, row_chunk):
        rc = min(row_chunk, tr - r0)
        for co in range(c_out):
            acc = jnp.full((rc, lane), b_ref[co], dtype=jnp.float32)
            for ci in range(c_in):
                xc = x_ref[0, ci, r0:r0 + rc, :].astype(jnp.float32)
                acc = acc + xc * w_ref[co, ci]          # VPU broadcast-FMA
            o_ref[0, co, r0:r0 + rc, :] = acc.astype(o_ref.dtype)


def outconv3d_pallas(x_ncdhw, weight, bias, *, lane=512, rows_per_tile=64):
    """1x1x1 Conv3d (OutConv3D forward).

    x_ncdhw: (N, C_in, D, H, W)
    weight:  (C_out, C_in) or (C_out, C_in, 1, 1, 1)
    bias:    (C_out,)
    returns: (N, C_out, D, H, W), dtype of x.
    """
    N, C_in, D, H, W = x_ncdhw.shape
    C_out = weight.shape[0]
    w2 = weight.reshape(C_out, C_in)   # squeeze the 1x1x1 kernel dims
    b1 = bias.reshape(C_out)

    DHW = D * H * W
    rows_per_tile = _round_up(rows_per_tile, 8)

    # Lane (last) dim: multiple of 128, at most `lane`.
    lane_eff = min(lane, _round_up(DHW, 128))
    # Sublane (rows) dim: ceil(DHW / lane_eff), padded to a tile multiple.
    s_rows = pl.cdiv(DHW, lane_eff)
    tr = min(rows_per_tile, s_rows)          # full dim, or a multiple of 8
    s_rows_pad = _round_up(s_rows, tr)
    DHW_pad = s_rows_pad * lane_eff

    # Free reshape (merges trailing dims) + cheap tail zero-pad of the
    # flattened spatial axis (no-op when shapes divide evenly).
    x_flat = x_ncdhw.reshape(N, C_in, DHW)
    if DHW_pad != DHW:
        x_flat = jnp.pad(x_flat, ((0, 0), (0, 0), (0, DHW_pad - DHW)))
    x4 = x_flat.reshape(N, C_in, s_rows_pad, lane_eff)

    grid = (N, s_rows_pad // tr)

    out4 = pl.pallas_call(
        functools.partial(_outconv_kernel, row_chunk=16),
        out_shape=jax.ShapeDtypeStruct((N, C_out, s_rows_pad, lane_eff),
                                       x_ncdhw.dtype),
        grid_spec=pltpu.PrefetchScalarGridSpec(
            num_scalar_prefetch=0,
            grid=grid,
            in_specs=[
                pl.BlockSpec((1, C_in, tr, lane_eff), lambda n, s: (n, 0, s, 0)),
                pl.BlockSpec(memory_space=pltpu.MemorySpace.SMEM),  # weight
                pl.BlockSpec(memory_space=pltpu.MemorySpace.SMEM),  # bias
            ],
            out_specs=pl.BlockSpec((1, C_out, tr, lane_eff),
                                   lambda n, s: (n, 0, s, 0)),
        ),
        compiler_params=pltpu.CompilerParams(
            dimension_semantics=("parallel", "parallel"),
        ),
    )(x4, w2, b1)

    out = out4.reshape(N, C_out, DHW_pad)[:, :, :DHW]
    return out.reshape(N, C_out, D, H, W)


def _reference(x, weight, bias):
    C_out = weight.shape[0]
    C_in = x.shape[1]
    return (jnp.einsum("ncdhw,oc->nodhw", x, weight.reshape(C_out, C_in))
            + bias[None, :, None, None, None])


if __name__ == "__main__":
    key = jax.random.PRNGKey(0)
    k_x, k_w, k_b, k_x2 = jax.random.split(key, 4)

    # Small shapes: batch=2, in_channels=4, out_channels=3, D=4, H=8, W=8
    N, C_in, C_out, D, H, W = 2, 4, 3, 4, 8, 8
    x = jax.random.normal(k_x, (N, C_in, D, H, W), dtype=jnp.float32)

    # PyTorch Conv3d default init: U(-1/sqrt(fan_in), 1/sqrt(fan_in))
    fan_in = C_in  # kernel_size = 1x1x1
    bound = 1.0 / (fan_in ** 0.5)
    weight = jax.random.uniform(k_w, (C_out, C_in, 1, 1, 1),
                                minval=-bound, maxval=bound, dtype=jnp.float32)
    bias = jax.random.uniform(k_b, (C_out,),
                              minval=-bound, maxval=bound, dtype=jnp.float32)

    out = outconv3d_pallas(x, weight, bias)
    out = jax.block_until_ready(out)
    assert out.shape == (N, C_out, D, H, W)
    assert jnp.allclose(out, _reference(x, weight, bias), atol=1e-5, rtol=1e-5)

    # Second check: ragged spatial size (exercises the lane-padding path).
    x2 = jax.random.normal(k_x2, (1, C_in, 3, 5, 7), dtype=jnp.float32)
    out2 = jax.block_until_ready(outconv3d_pallas(x2, weight, bias))
    assert out2.shape == (1, C_out, 3, 5, 7)
    assert jnp.allclose(out2, _reference(x2, weight, bias), atol=1e-5, rtol=1e-5)

    print("KERNEL_OK")
</pallas_src>

<mosaic_0001>
module attributes {stable_mosaic.version = 11 : i64} {
  func.func @_outconv_kernel(%arg0: i32, %arg1: i32, %arg2: memref<1x4x1x256xf32, #tpu.memory_space<vmem>>, %arg3: memref<3x4xf32, #tpu.memory_space<smem>>, %arg4: memref<3xf32, #tpu.memory_space<smem>>, %arg5: memref<1x3x1x256xf32, #tpu.memory_space<vmem>>) attributes {dimension_semantics = [#tpu.dimension_semantics<parallel>, #tpu.dimension_semantics<parallel>], iteration_bounds = array<i64: 2, 1>, scalar_prefetch = 0 : i64, scratch_operands = 0 : i64, tpu.core_type = #tpu.core_type<tc>, window_params = [{transform_indices = @transform_0, window_bounds = array<i64: 1, 4, 1, 256>}, {transform_indices = @transform_1, window_bounds = array<i64: 3, 4>}, {transform_indices = @transform_2, window_bounds = array<i64: 3>}, {transform_indices = @transform_3, window_bounds = array<i64: 1, 3, 1, 256>}]} {
    %c0 = arith.constant 0 : index
    %0 = memref.load %arg4[%c0] : memref<3xf32, #tpu.memory_space<smem>>
    %1 = vector.broadcast %0 : f32 to vector<1x256xf32>
    %c0_0 = arith.constant 0 : index
    %c0_1 = arith.constant 0 : index
    %c0_2 = arith.constant 0 : index
    %c0_3 = arith.constant 0 : index
    %2 = vector.load %arg2[%c0_0, %c0_1, %c0_2, %c0_3] : memref<1x4x1x256xf32, #tpu.memory_space<vmem>>, vector<1x1x1x256xf32>
    %3 = vector.shape_cast %2 : vector<1x1x1x256xf32> to vector<1x256xf32>
    %c0_4 = arith.constant 0 : index
    %c0_5 = arith.constant 0 : index
    %4 = memref.load %arg3[%c0_4, %c0_5] : memref<3x4xf32, #tpu.memory_space<smem>>
    %5 = vector.broadcast %4 : f32 to vector<1x256xf32>
    %6 = arith.mulf %3, %5 : vector<1x256xf32>
    %7 = arith.addf %1, %6 : vector<1x256xf32>
    %c0_6 = arith.constant 0 : index
    %c1 = arith.constant 1 : index
    %c0_7 = arith.constant 0 : index
    %c0_8 = arith.constant 0 : index
    %8 = vector.load %arg2[%c0_6, %c1, %c0_7, %c0_8] : memref<1x4x1x256xf32, #tpu.memory_space<vmem>>, vector<1x1x1x256xf32>
    %9 = vector.shape_cast %8 : vector<1x1x1x256xf32> to vector<1x256xf32>
    %c0_9 = arith.constant 0 : index
    %c1_10 = arith.constant 1 : index
    %10 = memref.load %arg3[%c0_9, %c1_10] : memref<3x4xf32, #tpu.memory_space<smem>>
    %11 = vector.broadcast %10 : f32 to vector<1x256xf32>
    %12 = arith.mulf %9, %11 : vector<1x256xf32>
    %13 = arith.addf %7, %12 : vector<1x256xf32>
    %c0_11 = arith.constant 0 : index
    %c2 = arith.constant 2 : index
    %c0_12 = arith.constant 0 : index
    %c0_13 = arith.constant 0 : index
    %14 = vector.load %arg2[%c0_11, %c2, %c0_12, %c0_13] : memref<1x4x1x256xf32, #tpu.memory_space<vmem>>, vector<1x1x1x256xf32>
    %15 = vector.shape_cast %14 : vector<1x1x1x256xf32> to vector<1x256xf32>
    %c0_14 = arith.constant 0 : index
    %c2_15 = arith.constant 2 : index
    %16 = memref.load %arg3[%c0_14, %c2_15] : memref<3x4xf32, #tpu.memory_space<smem>>
    %17 = vector.broadcast %16 : f32 to vector<1x256xf32>
    %18 = arith.mulf %15, %17 : vector<1x256xf32>
    %19 = arith.addf %13, %18 : vector<1x256xf32>
    %c0_16 = arith.constant 0 : index
    %c3 = arith.constant 3 : index
    %c0_17 = arith.constant 0 : index
    %c0_18 = arith.constant 0 : index
    %20 = vector.load %arg2[%c0_16, %c3, %c0_17, %c0_18] : memref<1x4x1x256xf32, #tpu.memory_space<vmem>>, vector<1x1x1x256xf32>
    %21 = vector.shape_cast %20 : vector<1x1x1x256xf32> to vector<1x256xf32>
    %c0_19 = arith.constant 0 : index
    %c3_20 = arith.constant 3 : index
    %22 = memref.load %arg3[%c0_19, %c3_20] : memref<3x4xf32, #tpu.memory_space<smem>>
    %23 = vector.broadcast %22 : f32 to vector<1x256xf32>
    %24 = arith.mulf %21, %23 : vector<1x256xf32>
    %25 = arith.addf %19, %24 : vector<1x256xf32>
    %c0_21 = arith.constant 0 : index
    %c0_22 = arith.constant 0 : index
    %c0_23 = arith.constant 0 : index
    %c0_24 = arith.constant 0 : index
    %26 = vector.load %arg5[%c0_21, %c0_22, %c0_23, %c0_24] : memref<1x3x1x256xf32, #tpu.memory_space<vmem>>, vector<1x1x1x256xf32>
    %27 = vector.shape_cast %26 : vector<1x1x1x256xf32> to vector<1x256xf32>
    %28 = vector.shape_cast %25 : vector<1x256xf32> to vector<1x1x1x256xf32>
    tpu.vector_store %arg5[%c0_21, %c0_22, %c0_23, %c0_24], %28 {strides = array<i32>} : memref<1x3x1x256xf32, #tpu.memory_space<vmem>>, vector<1x1x1x256xf32>,
    %c1_25 = arith.constant 1 : index
    %29 = memref.load %arg4[%c1_25] : memref<3xf32, #tpu.memory_space<smem>>
    %30 = vector.broadcast %29 : f32 to vector<1x256xf32>
    %c0_26 = arith.constant 0 : index
    %c0_27 = arith.constant 0 : index
    %c0_28 = arith.constant 0 : index
    %c0_29 = arith.constant 0 : index
    %31 = vector.load %arg2[%c0_26, %c0_27, %c0_28, %c0_29] : memref<1x4x1x256xf32, #tpu.memory_space<vmem>>, vector<1x1x1x256xf32>
    %32 = vector.shape_cast %31 : vector<1x1x1x256xf32> to vector<1x256xf32>
    %c1_30 = arith.constant 1 : index
    %c0_31 = arith.constant 0 : index
    %33 = memref.load %arg3[%c1_30, %c0_31] : memref<3x4xf32, #tpu.memory_space<smem>>
    %34 = vector.broadcast %33 : f32 to vector<1x256xf32>
    %35 = arith.mulf %32, %34 : vector<1x256xf32>
    %36 = arith.addf %30, %35 : vector<1x256xf32>
    %c0_32 = arith.constant 0 : index
    %c1_33 = arith.constant 1 : index
    %c0_34 = arith.constant 0 : index
    %c0_35 = arith.constant 0 : index
    %37 = vector.load %arg2[%c0_32, %c1_33, %c0_34, %c0_35] : memref<1x4x1x256xf32, #tpu.memory_space<vmem>>, vector<1x1x1x256xf32>
    %38 = vector.shape_cast %37 : vector<1x1x1x256xf32> to vector<1x256xf32>
    %c1_36 = arith.constant 1 : index
    %c1_37 = arith.constant 1 : index
    %39 = memref.load %arg3[%c1_36, %c1_37] : memref<3x4xf32, #tpu.memory_space<smem>>
    %40 = vector.broadcast %39 : f32 to vector<1x256xf32>
    %41 = arith.mulf %38, %40 : vector<1x256xf32>
    %42 = arith.addf %36, %41 : vector<1x256xf32>
    %c0_38 = arith.constant 0 : index
    %c2_39 = arith.constant 2 : index
    %c0_40 = arith.constant 0 : index
    %c0_41 = arith.constant 0 : index
    %43 = vector.load %arg2[%c0_38, %c2_39, %c0_40, %c0_41] : memref<1x4x1x256xf32, #tpu.memory_space<vmem>>, vector<1x1x1x256xf32>
    %44 = vector.shape_cast %43 : vector<1x1x1x256xf32> to vector<1x256xf32>
    %c1_42 = arith.constant 1 : index
    %c2_43 = arith.constant 2 : index
    %45 = memref.load %arg3[%c1_42, %c2_43] : memref<3x4xf32, #tpu.memory_space<smem>>
    %46 = vector.broadcast %45 : f32 to vector<1x256xf32>
    %47 = arith.mulf %44, %46 : vector<1x256xf32>
    %48 = arith.addf %42, %47 : vector<1x256xf32>
    %c0_44 = arith.constant 0 : index
    %c3_45 = arith.constant 3 : index
    %c0_46 = arith.constant 0 : index
    %c0_47 = arith.constant 0 : index
    %49 = vector.load %arg2[%c0_44, %c3_45, %c0_46, %c0_47] : memref<1x4x1x256xf32, #tpu.memory_space<vmem>>, vector<1x1x1x256xf32>
    %50 = vector.shape_cast %49 : vector<1x1x1x256xf32> to vector<1x256xf32>
    %c1_48 = arith.constant 1 : index
    %c3_49 = arith.constant 3 : index
    %51 = memref.load %arg3[%c1_48, %c3_49] : memref<3x4xf32, #tpu.memory_space<smem>>
    %52 = vector.broadcast %51 : f32 to vector<1x256xf32>
    %53 = arith.mulf %50, %52 : vector<1x256xf32>
    %54 = arith.addf %48, %53 : vector<1x256xf32>
    %c0_50 = arith.constant 0 : index
    %c1_51 = arith.constant 1 : index
    %c0_52 = arith.constant 0 : index
    %c0_53 = arith.constant 0 : index
    %55 = vector.load %arg5[%c0_50, %c1_51, %c0_52, %c0_53] : memref<1x3x1x256xf32, #tpu.memory_space<vmem>>, vector<1x1x1x256xf32>
    %56 = vector.shape_cast %55 : vector<1x1x1x256xf32> to vector<1x256xf32>
    %57 = vector.shape_cast %54 : vector<1x256xf32> to vector<1x1x1x256xf32>
    tpu.vector_store %arg5[%c0_50, %c1_51, %c0_52, %c0_53], %57 {strides = array<i32>} : memref<1x3x1x256xf32, #tpu.memory_space<vmem>>, vector<1x1x1x256xf32>,
    %c2_54 = arith.constant 2 : index
    %58 = memref.load %arg4[%c2_54] : memref<3xf32, #tpu.memory_space<smem>>
    %59 = vector.broadcast %58 : f32 to vector<1x256xf32>
    %c0_55 = arith.constant 0 : index
    %c0_56 = arith.constant 0 : index
    %c0_57 = arith.constant 0 : index
    %c0_58 = arith.constant 0 : index
    %60 = vector.load %arg2[%c0_55, %c0_56, %c0_57, %c0_58] : memref<1x4x1x256xf32, #tpu.memory_space<vmem>>, vector<1x1x1x256xf32>
    %61 = vector.shape_cast %60 : vector<1x1x1x256xf32> to vector<1x256xf32>
    %c2_59 = arith.constant 2 : index
    %c0_60 = arith.constant 0 : index
    %62 = memref.load %arg3[%c2_59, %c0_60] : memref<3x4xf32, #tpu.memory_space<smem>>
    %63 = vector.broadcast %62 : f32 to vector<1x256xf32>
    %64 = arith.mulf %61, %63 : vector<1x256xf32>
    %65 = arith.addf %59, %64 : vector<1x256xf32>
    %c0_61 = arith.constant 0 : index
    %c1_62 = arith.constant 1 : index
    %c0_63 = arith.constant 0 : index
    %c0_64 = arith.constant 0 : index
    %66 = vector.load %arg2[%c0_61, %c1_62, %c0_63, %c0_64] : memref<1x4x1x256xf32, #tpu.memory_space<vmem>>, vector<1x1x1x256xf32>
    %67 = vector.shape_cast %66 : vector<1x1x1x256xf32> to vector<1x256xf32>
    %c2_65 = arith.constant 2 : index
    %c1_66 = arith.constant 1 : index
    %68 = memref.load %arg3[%c2_65, %c1_66] : memref<3x4xf32, #tpu.memory_space<smem>>
    %69 = vector.broadcast %68 : f32 to vector<1x256xf32>
    %70 = arith.mulf %67, %69 : vector<1x256xf32>
    %71 = arith.addf %65, %70 : vector<1x256xf32>
    %c0_67 = arith.constant 0 : index
    %c2_68 = arith.constant 2 : index
    %c0_69 = arith.constant 0 : index
    %c0_70 = arith.constant 0 : index
    %72 = vector.load %arg2[%c0_67, %c2_68, %c0_69, %c0_70] : memref<1x4x1x256xf32, #tpu.memory_space<vmem>>, vector<1x1x1x256xf32>
    %73 = vector.shape_cast %72 : vector<1x1x1x256xf32> to vector<1x256xf32>
    %c2_71 = arith.constant 2 : index
    %c2_72 = arith.constant 2 : index
    %74 = memref.load %arg3[%c2_71, %c2_72] : memref<3x4xf32, #tpu.memory_space<smem>>
    %75 = vector.broadcast %74 : f32 to vector<1x256xf32>
    %76 = arith.mulf %73, %75 : vector<1x256xf32>
    %77 = arith.addf %71, %76 : vector<1x256xf32>
    %c0_73 = arith.constant 0 : index
    %c3_74 = arith.constant 3 : index
    %c0_75 = arith.constant 0 : index
    %c0_76 = arith.constant 0 : index
    %78 = vector.load %arg2[%c0_73, %c3_74, %c0_75, %c0_76] : memref<1x4x1x256xf32, #tpu.memory_space<vmem>>, vector<1x1x1x256xf32>
    %79 = vector.shape_cast %78 : vector<1x1x1x256xf32> to vector<1x256xf32>
    %c2_77 = arith.constant 2 : index
    %c3_78 = arith.constant 3 : index
    %80 = memref.load %arg3[%c2_77, %c3_78] : memref<3x4xf32, #tpu.memory_space<smem>>
    %81 = vector.broadcast %80 : f32 to vector<1x256xf32>
    %82 = arith.mulf %79, %81 : vector<1x256xf32>
    %83 = arith.addf %77, %82 : vector<1x256xf32>
    %c0_79 = arith.constant 0 : index
    %c2_80 = arith.constant 2 : index
    %c0_81 = arith.constant 0 : index
    %c0_82 = arith.constant 0 : index
    %84 = vector.load %arg5[%c0_79, %c2_80, %c0_81, %c0_82] : memref<1x3x1x256xf32, #tpu.memory_space<vmem>>, vector<1x1x1x256xf32>
    %85 = vector.shape_cast %84 : vector<1x1x1x256xf32> to vector<1x256xf32>
    %86 = vector.shape_cast %83 : vector<1x256xf32> to vector<1x1x1x256xf32>
    tpu.vector_store %arg5[%c0_79, %c2_80, %c0_81, %c0_82], %86 {strides = array<i32>} : memref<1x3x1x256xf32, #tpu.memory_space<vmem>>, vector<1x1x1x256xf32>,
    return
  }
  func.func @transform_0(%arg0: i32, %arg1: i32) -> (i32, i32, i32, i32) {
    %c0_i32 = arith.constant 0 : i32
    %c0_i32_0 = arith.constant 0 : i32
    %c0_i32_1 = arith.constant 0 : i32
    return %arg0, %c0_i32, %arg1, %c0_i32_0 : i32, i32, i32, i32
  }
  func.func @transform_1(%arg0: i32, %arg1: i32) -> (i32, i32) {
    %c0_i32 = arith.constant 0 : i32
    %c0_i32_0 = arith.constant 0 : i32
    %c0_i32_1 = arith.constant 0 : i32
    return %c0_i32, %c0_i32_0 : i32, i32
  }
  func.func @transform_2(%arg0: i32, %arg1: i32) -> i32 {
    %c0_i32 = arith.constant 0 : i32
    %c0_i32_0 = arith.constant 0 : i32
    return %c0_i32 : i32
  }
  func.func @transform_3(%arg0: i32, %arg1: i32) -> (i32, i32, i32, i32) {
    %c0_i32 = arith.constant 0 : i32
    %c0_i32_0 = arith.constant 0 : i32
    %c0_i32_1 = arith.constant 0 : i32
    return %arg0, %c0_i32, %arg1, %c0_i32_0 : i32, i32, i32, i32
  }
}

</mosaic_0001>

<llo_original>
// kernel: tpu_custom_call.1
$region0: #{tpu_custom_call.1}
  #allocation0 [shape = 'u32[]', space=smem, size = 0x4, offset = 0x4, fixed_abs, tag = 'smem constant byte address 0x4 - core index']
  #allocation1 [shape = 'u32[144,128]{1,0:T(1,128)}', space=vmem, size = 0x12000, scoped, tag = 'internal scratch']
  %s0 = inlined_call_operand.hbm [shape: f32[2,4,1,256], index: 0, kind: input, shape index: {}]
  %s1 = inlined_call_operand.hbm [shape: f32[3,4], index: 1, kind: input, shape index: {}]
  %s2 = inlined_call_operand.vmem [shape: f32[3], index: 2, kind: input, shape index: {}]
  %s3 = inlined_call_operand.hbm [shape: f32[2,3,1,256], index: 3, kind: output, shape index: {}]
  %s4 = sld [smem:[#allocation0]]
  $region57: #{tpu_custom_call.1} parent=0
    _
  %s6 = ssub.s32 1, %s4
  %s7 = scalar_select 0, %s6, %s4
  $region1: #{tpu_custom_call.1} parent=0
    #allocation2 [shape = 'u8[8192]{0}', space=vmem, size = 0x2000, scoped, tag = 'input window, operand 0']
    #allocation3 [shape = 's32[2]{0}', space=sflag, size = 0x8, scoped, tag = 'scoped memory for tpu_custom_call.1']
    #allocation4 [shape = 's32[2]{0}', space=sflag, size = 0x8, scoped, tag = 'scoped memory for tpu_custom_call.1']
    #allocation5 [shape = 's32[2]{0}', space=sflag, size = 0x8, scoped, tag = 'scoped memory for tpu_custom_call.1']
    #allocation6 [shape = 's32[2]{0}', space=sflag, size = 0x8, scoped, tag = 'scoped memory for tpu_custom_call.1']
    #allocation7 [shape = 'u8[2048]{0}', space=smem, size = 0x800, scoped, tag = 'input window, operand 1, single buffered']
    #allocation8 [shape = 'u8[512]{0}', space=smem, size = 0x200, scoped, tag = 'input window, operand 2, single buffered']
    #allocation9 [shape = 'u8[6144]{0}', space=vmem, size = 0x1800, scoped, tag = 'output window, operand 0']
    %8 = vsyncpa [#allocation3], 0
    %s9 = scalar_lea.sflag [#allocation3], 1
    %10 = vsyncpa %s9, 0
    %11 = vsyncpa [#allocation5], 0
    %12 = vsyncpa [#allocation6], 0
    %13 = vsyncpa [#allocation4], 0
    %s14 = scalar_lea.sflag [#allocation4], 1
    %15 = vsyncpa %s14, 0
    loop: start=0, step=1, limit=4
    $region2: #{tpu_custom_call.1} parent=1 // loop_pre_header
      _
    $region3: #{tpu_custom_call.1} parent=1 // loop_header
      %s17 = sphi 0, %s21
      %p18 = scmp.ge.s32.totalorder %s17, 4
      %s24 = sphi 0, %s36
      %s25 = sphi 0, %s32
      %s26 = sphi 0, %s24
      %s27 = sphi 0, %s25
      %s28 = sphi 0, %s26
      %s29 = sphi 0, %s27
      %s41 = sphi 0, %s43
      %s44 = sphi 0, %s41
      %s45 = sphi 0, %s44
      %s61 = sphi 0, %s45
      %s65 = sphi 0, %s65
      %s67 = sphi 0, %s65
      %s68 = sphi 0, %s67
      %s82 = sphi 0, %s68
      %s86 = sphi 0, %s86
      %s88 = sphi 0, %s86
      %s89 = sphi 0, %s88
      %s103 = sphi 0, %s89
      %s111 = sphi 0, %s113
      %s114 = sphi 0, %s111
      %s115 = sphi 0, %s114
      %s131 = sphi 0, %s115
    $region4: #{tpu_custom_call.1} parent=1 // loop_header_branch
      %20 = sbr.rel (%p18) target = $region8
    $region5: #{tpu_custom_call.1} parent=1 // loop_body
      %s22 = ssub.s32 %s17, 1
      %s23 = ssub.s32 %s17, 2
      %s30 = sadd.s32 1, %s25
      %p31 = scmp.ge.s32.totalorder %s30, 1
      %s32 = scalar_select %p31, 0, %s30
      %s33 = sadd.s32 1, %s24
      %s34 = scalar_select %p31, %s33, %s24
      %p35 = scmp.ge.s32.totalorder %s34, 2
      %s36 = scalar_select %p35, 0, %s34
      %s37 = ssub.s32 %s24, %s36
      %s38 = ssub.s32 %s25, %s32
      %s39 = sor.u32 %s37, %s38
      %p40 = scmp.eq.s32.totalorder %s39, 0
      %s42 = sadd.s32 %s41, 1
      %s43 = scalar_select %p40, %s41, %s42
      %p46 = pneg %p40
      %p47 = scmp.eq.s32.totalorder %s17, 1
      %p48 = por %p46, %p47
      %p49 = scmp.ne.s32.totalorder %s41, %s44
      %p50 = scmp.eq.s32.totalorder %s17, 0
      %p51 = por %p49, %p50
      %p52 = scmp.ne.s32.totalorder %s41, %s44
      %p53 = scmp.eq.s32.totalorder %s22, 1
      %p54 = por %p52, %p53
      %p55 = scmp.ne.s32.totalorder %s44, %s45
      %p56 = scmp.eq.s32.totalorder %s22, 0
      %p57 = por %p55, %p56
      %p58 = scmp.ne.s32.totalorder %s44, %s45
      %p59 = scmp.eq.s32.totalorder %s23, 1
      %p60 = por %p58, %p59
      %p62 = scmp.ne.s32.totalorder %s45, %s61
      %p63 = scmp.eq.s32.totalorder %s23, 0
      %p64 = por %p62, %p63
      %s66 = sadd.s32 %s65, 1
      %p69 = scmp.eq.s32.totalorder %s17, 1
      %p70 = scmp.ne.s32.totalorder %s65, %s67
      %p71 = scmp.eq.s32.totalorder %s17, 0
      %p72 = por %p70, %p71
      %p73 = scmp.ne.s32.totalorder %s65, %s67
      %p74 = scmp.eq.s32.totalorder %s22, 1
      %p75 = por %p73, %p74
      %p76 = scmp.ne.s32.totalorder %s67, %s68
      %p77 = scmp.eq.s32.totalorder %s22, 0
      %p78 = por %p76, %p77
      %p79 = scmp.ne.s32.totalorder %s67, %s68
      %p80 = scmp.eq.s32.totalorder %s23, 1
      %p81 = por %p79, %p80
      %p83 = scmp.ne.s32.totalorder %s68, %s82
      %p84 = scmp.eq.s32.totalorder %s23, 0
      %p85 = por %p83, %p84
      %s87 = sadd.s32 %s86, 1
      %p90 = scmp.eq.s32.totalorder %s17, 1
      %p91 = scmp.ne.s32.totalorder %s86, %s88
      %p92 = scmp.eq.s32.totalorder %s17, 0
      %p93 = por %p91, %p92
      %p94 = scmp.ne.s32.totalorder %s86, %s88
      %p95 = scmp.eq.s32.totalorder %s22, 1
      %p96 = por %p94, %p95
      %p97 = scmp.ne.s32.totalorder %s88, %s89
      %p98 = scmp.eq.s32.totalorder %s22, 0
      %p99 = por %p97, %p98
      %p100 = scmp.ne.s32.totalorder %s88, %s89
      %p101 = scmp.eq.s32.totalorder %s23, 1
      %p102 = por %p100, %p101
      %p104 = scmp.ne.s32.totalorder %s89, %s103
      %p105 = scmp.eq.s32.totalorder %s23, 0
      %p106 = por %p104, %p105
      %s107 = ssub.s32 %s24, %s36
      %s108 = ssub.s32 %s25, %s32
      %s109 = sor.u32 %s107, %s108
      %p110 = scmp.eq.s32.totalorder %s109, 0
      %s112 = sadd.s32 %s111, 1
      %s113 = scalar_select %p110, %s111, %s112
      %p116 = pneg %p110
      %p117 = scmp.eq.s32.totalorder %s17, 1
      %p118 = por %p116, %p117
      %p119 = scmp.ne.s32.totalorder %s111, %s114
      %p120 = scmp.eq.s32.totalorder %s17, 0
      %p121 = por %p119, %p120
      %p122 = scmp.ne.s32.totalorder %s111, %s114
      %p123 = scmp.eq.s32.totalorder %s22, 1
      %p124 = por %p122, %p123
      %p125 = scmp.ne.s32.totalorder %s114, %s115
      %p126 = scmp.eq.s32.totalorder %s22, 0
      %p127 = por %p125, %p126
      %p128 = scmp.ne.s32.totalorder %s114, %s115
      %p129 = scmp.eq.s32.totalorder %s23, 1
      %p130 = por %p128, %p129
      %p132 = scmp.ne.s32.totalorder %s115, %s131
      %p133 = scmp.eq.s32.totalorder %s23, 0
      %p134 = por %p132, %p133
      %p135 = scmp.le.s32.totalorder 1, %s17
      %p136 = scmp.lt.s32.totalorder %s17, 3
      %p137 = pnand %p135, %p136
      %p138 = pneg %p137
      // Predicated region
      $region9: #{tpu_custom_call.1} parent=5 // pred_check
        _
      $region10: #{tpu_custom_call.1} parent=5 // pred_check_branch
        %140 = sbr.rel (%p137) target = $region12
      $region11: #{tpu_custom_call.1} parent=5 // pred_region
        %s141 = ssub.s32 %s17, 1
        // Predicated region
        $region13: #{tpu_custom_call.1} parent=11 // pred_check
          %p142 = pneg %p78
        $region14: #{tpu_custom_call.1} parent=11 // pred_check_branch
          %144 = sbr.rel (%p142) target = $region16
        $region15: #{tpu_custom_call.1} parent=11 // pred_region
          %s146 = ssub.s32 64, 64
          %147 = vsyncadd [#allocation5], %s146
          %150 = dma.hbm_to_smem %s1, 64, [#allocation7], [#allocation5]
        $region16: #{tpu_custom_call.1} parent=11 // pred_fallthru
          _
        // Predicated region
        $region17: #{tpu_custom_call.1} parent=11 // pred_check
          %p151 = pneg %p99
        $region18: #{tpu_custom_call.1} parent=11 // pred_check_branch
          %153 = sbr.rel (%p151) target = $region20
        $region19: #{tpu_custom_call.1} parent=11 // pred_region
          %s155 = ssub.s32 16, 16
          %156 = vsyncadd [#allocation6], %s155
          %s158 = sshll.u32 %s2, 4
          %s159 = int_to_ptr.vmem [resolvable:$true] %s158
          %161 = dma.vmem_to_smem %s159, 16, [#allocation8], [#allocation6]
        $region20: #{tpu_custom_call.1} parent=11 // pred_fallthru
          _
      $region12: #{tpu_custom_call.1} parent=5 // pred_fallthru
        _
      %p162 = scmp.lt.s32.totalorder %s17, 2
      // Predicated region
      $region21: #{tpu_custom_call.1} parent=5 // pred_check
        %p163 = pneg %p162
      $region22: #{tpu_custom_call.1} parent=5 // pred_check_branch
        %165 = sbr.rel (%p163) target = $region24
      $region23: #{tpu_custom_call.1} parent=5 // pred_region
        // Predicated region
        $region25: #{tpu_custom_call.1} parent=23 // pred_check
          %p166 = pneg %p51
        $region26: #{tpu_custom_call.1} parent=23 // pred_check_branch
          %168 = sbr.rel (%p166) target = $region28
        $region27: #{tpu_custom_call.1} parent=23 // pred_region
          %s169 = sand.u32 %s41, 1
          %s170 = scalar_lea.sflag [#allocation3], %s169
          %s171 = sand.u32 %s41, 1
          %s172 = smul.addr %s171, 8
          %s173 = scalar_lea.vmem [#allocation2], %s172
          %s175 = ssub.s32 128, 128
          %176 = vsyncadd %s170, %s175
          %s177 = smul.addr %s25, 2
          %s178 = smul.addr %s24, 8
          %s179 = sadd.s32 %s177, %s178
          %s180 = smul.addr %s179, 16
          %s181 = scalar_lea.hbm %s0, %s180
          %s182 = sshll.u32 %s173, 4
          %s183 = int_to_ptr.vmem [resolvable:$true] %s182
          %188 = dma.hbm_to_vmem [thread:$0]  %s181, 128, %s183, %s170, 32, 32, 2
        $region28: #{tpu_custom_call.1} parent=23 // pred_fallthru
          _
      $region24: #{tpu_custom_call.1} parent=5 // pred_fallthru
        _
      %p189 = scmp.le.s32.totalorder 1, %s17
      %p190 = scmp.lt.s32.totalorder %s17, 3
      %p191 = pnand %p189, %p190
      %p192 = pneg %p191
      // Predicated region
      $region29: #{tpu_custom_call.1} parent=5 // pred_check
        _
      $region30: #{tpu_custom_call.1} parent=5 // pred_check_branch
        %194 = sbr.rel (%p191) target = $region32
      $region31: #{tpu_custom_call.1} parent=5 // pred_region
        %s195 = ssub.s32 %s17, 1
        %s196 = sand.u32 %s44, 1
        %s197 = scalar_lea.sflag [#allocation3], %s196
        %s198 = sand.u32 %s44, 1
        %s199 = smul.addr %s198, 8
        %s200 = scalar_lea.vmem [#allocation2], %s199
        // Predicated region
        $region33: #{tpu_custom_call.1} parent=31 // pred_check
          %p201 = pneg %p57
        $region34: #{tpu_custom_call.1} parent=31 // pred_check_branch
          %203 = sbr.rel (%p201) target = $region36
        $region35: #{tpu_custom_call.1} parent=31 // pred_region
          %204 = dma.done %s197, 128
        $region36: #{tpu_custom_call.1} parent=31 // pred_fallthru
          _
        // Predicated region
        $region37: #{tpu_custom_call.1} parent=31 // pred_check
          %p205 = pneg %p78
        $region38: #{tpu_custom_call.1} parent=31 // pred_check_branch
          %207 = sbr.rel (%p205) target = $region40
        $region39: #{tpu_custom_call.1} parent=31 // pred_region
          %208 = dma.done [#allocation5], 64
        $region40: #{tpu_custom_call.1} parent=31 // pred_fallthru
          _
        // Predicated region
        $region41: #{tpu_custom_call.1} parent=31 // pred_check
          %p209 = pneg %p99
        $region42: #{tpu_custom_call.1} parent=31 // pred_check_branch
          %211 = sbr.rel (%p209) target = $region44
        $region43: #{tpu_custom_call.1} parent=31 // pred_region
          %212 = dma.done [#allocation6], 16
        $region44: #{tpu_custom_call.1} parent=31 // pred_fallthru
          _
        %213 = sfence
        %s214 = sand.u32 %s44, 1
        %s215 = scalar_lea.sflag [#allocation3], %s214
        %s216 = sand.u32 %s44, 1
        %s217 = smul.addr %s216, 8
        %s218 = scalar_lea.vmem [#allocation2], %s217
        %p219 = pneg %p57
        %p220 = pneg %p54
        %p221 = pneg %p78
        %p222 = pneg %p75
        %p223 = pneg %p99
        %p224 = pneg %p96
        %p225 = pneg %p127
        %p226 = pneg %p124
        %s227 = sand.u32 %s114, 1
        %s228 = scalar_lea.sflag [#allocation4], %s227
        %s229 = sand.u32 %s114, 1
        %s230 = smul.addr %s229, 6
        %s231 = scalar_lea.vmem [#allocation9], %s230
        %s232 = sld [smem:[#allocation8]]
        %v233 = vstv %s232
        %v234 = vld [vmem:[%s200] sm:$0x3]
        %s235 = sld [smem:[#allocation7]]
        %v236 = vstv %s235
        %v237 = vmul.f32 %v234, %v236
        %v238 = vadd.f32 %v233, %v237
        %s239 = scalar_lea.vmem %s200, 2 [#allocation2]
        %v240 = vld [vmem:[%s239] sm:$0x3]
        %s241 = sld [smem:[#allocation7 + $0x1]]
        %v242 = vstv %s241
        %v243 = vmul.f32 %v240, %v242
        %v244 = vadd.f32 %v238, %v243
        %s245 = scalar_lea.vmem %s200, 4 [#allocation2]
        %v246 = vld [vmem:[%s245] sm:$0x3]
        %s247 = sld [smem:[#allocation7 + $0x2]]
        %v248 = vstv %s247
        %v249 = vmul.f32 %v246, %v248
        %v250 = vadd.f32 %v244, %v249
        %s251 = scalar_lea.vmem %s200, 6 [#allocation2]
        %v252 = vld [vmem:[%s251] sm:$0x3]
        %s253 = sld [smem:[#allocation7 + $0x3]]
        %v254 = vstv %s253
        %v255 = vmul.f32 %v252, %v254
        %v256 = vadd.f32 %v250, %v255
        %v257 = vlaneseq
        %vm258 = vcmp.ge.s32.totalorder %v257, 0
        %vm259 = vcmp.lt.s32.totalorder %v257, 256
        %vm260 = vmand %vm258, %vm259
        %261 = vst.msk [vmem:[%s231] sm:$0x3] %vm260, %v256
        %s262 = sld [smem:[#allocation8 + $0x1]]
        %v263 = vstv %s262
        %v264 = vld [vmem:[%s200] sm:$0x3]
        %s265 = sld [smem:[#allocation7 + $0x80]]
        %v266 = vstv %s265
        %v267 = vmul.f32 %v264, %v266
        %v268 = vadd.f32 %v263, %v267
        %v269 = vld [vmem:[%s239] sm:$0x3]
        %s270 = sld [smem:[#allocation7 + $0x81]]
        %v271 = vstv %s270
        %v272 = vmul.f32 %v269, %v271
        %v273 = vadd.f32 %v268, %v272
        %v274 = vld [vmem:[%s245] sm:$0x3]
        %s275 = sld [smem:[#allocation7 + $0x82]]
        %v276 = vstv %s275
        %v277 = vmul.f32 %v274, %v276
        %v278 = vadd.f32 %v273, %v277
        %v279 = vld [vmem:[%s251] sm:$0x3]
        %s280 = sld [smem:[#allocation7 + $0x83]]
        %v281 = vstv %s280
        %v282 = vmul.f32 %v279, %v281
        %v283 = vadd.f32 %v278, %v282
        %s284 = scalar_lea.vmem %s231, 2 [#allocation9]
        %285 = vst.msk [vmem:[%s284] sm:$0x3] %vm260, %v283
        %s286 = sld [smem:[#allocation8 + $0x2]]
        %v287 = vstv %s286
        %v288 = vld [vmem:[%s200] sm:$0x3]
        %s289 = sld [smem:[#allocation7 + $0x100]]
        %v290 = vstv %s289
        %v291 = vmul.f32 %v288, %v290
        %v292 = vadd.f32 %v287, %v291
        %v293 = vld [vmem:[%s239] sm:$0x3]
        %s294 = sld [smem:[#allocation7 + $0x101]]
        %v295 = vstv %s294
        %v296 = vmul.f32 %v293, %v295
        %v297 = vadd.f32 %v292, %v296
        %v298 = vld [vmem:[%s245] sm:$0x3]
        %s299 = sld [smem:[#allocation7 + $0x102]]
        %v300 = vstv %s299
        %v301 = vmul.f32 %v298, %v300
        %v302 = vadd.f32 %v297, %v301
        %v303 = vld [vmem:[%s251] sm:$0x3]
        %s304 = sld [smem:[#allocation7 + $0x103]]
        %v305 = vstv %s304
        %v306 = vmul.f32 %v303, %v305
        %v307 = vadd.f32 %v302, %v306
        %s308 = scalar_lea.vmem %s231, 4 [#allocation9]
        %309 = vst.msk [vmem:[%s308] sm:$0x3] %vm260, %v307
        %s310 = sand.u32 %s114, 1
        %s311 = scalar_lea.sflag [#allocation4], %s310
        %s312 = sand.u32 %s114, 1
        %s313 = smul.addr %s312, 6
        %s314 = scalar_lea.vmem [#allocation9], %s313
        // Predicated region
        $region45: #{tpu_custom_call.1} parent=31 // pred_check
          %p315 = pneg %p124
        $region46: #{tpu_custom_call.1} parent=31 // pred_check_branch
          %317 = sbr.rel (%p315) target = $region48
        $region47: #{tpu_custom_call.1} parent=31 // pred_region
          %s319 = ssub.s32 96, 96
          %320 = vsyncadd %s311, %s319
          %s321 = smul.addr %s27, 2
          %s322 = smul.addr %s26, 6
          %s323 = sadd.s32 %s321, %s322
          %s324 = smul.addr %s323, 16
          %s325 = scalar_lea.hbm %s3, %s324
          %s326 = sshll.u32 %s314, 4
          %s327 = int_to_ptr.vmem [resolvable:$true] %s326
          %332 = dma.vmem_to_hbm [thread:$0]  %s327, 96, %s325, %s311, 32, 32, 2
        $region48: #{tpu_custom_call.1} parent=31 // pred_fallthru
          _
      $region32: #{tpu_custom_call.1} parent=5 // pred_fallthru
        _
      %p333 = scmp.le.s32.totalorder 2, %s17
      // Predicated region
      $region49: #{tpu_custom_call.1} parent=5 // pred_check
        %p334 = pneg %p333
      $region50: #{tpu_custom_call.1} parent=5 // pred_check_branch
        %336 = sbr.rel (%p334) target = $region52
      $region51: #{tpu_custom_call.1} parent=5 // pred_region
        %s337 = ssub.s32 %s17, 2
        // Predicated region
        $region53: #{tpu_custom_call.1} parent=51 // pred_check
          %p338 = pneg %p130
        $region54: #{tpu_custom_call.1} parent=51 // pred_check_branch
          %340 = sbr.rel (%p338) target = $region56
        $region55: #{tpu_custom_call.1} parent=51 // pred_region
          %s341 = sand.u32 %s115, 1
          %s342 = scalar_lea.sflag [#allocation4], %s341
          %s343 = sand.u32 %s115, 1
          %s344 = smul.addr %s343, 6
          %s345 = scalar_lea.vmem [#allocation9], %s344
          %346 = dma.done %s342, 96
        $region56: #{tpu_custom_call.1} parent=51 // pred_fallthru
          _
      $region52: #{tpu_custom_call.1} parent=5 // pred_fallthru
        _
    $region6: #{tpu_custom_call.1} parent=1 // loop_footer
      %s21 = sadd.s32 1, %s17
    $region7: #{tpu_custom_call.1} parent=1 // loop_footer_branch
      %16 = sbr.rel target = $region3
    $region8: #{tpu_custom_call.1} parent=1 // loop_exit
      _
    %347 = vsyncpa [#allocation3], 1
    %s348 = scalar_lea.sflag [#allocation3], 1
    %349 = vsyncpa %s348, 1
    %350 = vsyncpa [#allocation4], 1
    %s351 = scalar_lea.sflag [#allocation4], 1
    %352 = vsyncpa %s351, 1
    %353 = vsyncpa [#allocation5], 1
    %s354 = scalar_lea.sflag [#allocation5], 1
    %355 = vsyncpa %s354, 1
    %356 = vsyncpa [#allocation6], 1
    %s357 = scalar_lea.sflag [#allocation6], 1
    %358 = vsyncpa %s357, 1

</llo_original>
